<compile_context>
chip_gen: v7x
topology: tpu7x:2x2x1
jax: 0.10.0
libtpu: 0.0.40
codegen_flags: <defaults>
</compile_context>

<pallas_src>
import functools

import jax
import jax.numpy as jnp
import numpy as np
from jax.experimental import pallas as pl
from jax.experimental.pallas import tpu as pltpu


def _dwconv3x3_flat(x, taps, w_idx, h_idx, H, W):
    """Depthwise 3x3 conv (stride 1, zero pad 1) on lane-flattened spatial data.

    x      : (Nb, Cb, H*W) f32 -- lane axis is the flattened (h, w) plane.
    taps   : (Cb, 9)  f32 -- per-channel taps, row-major (ki*3 + kj).
    w_idx  : (1, H*W) i32 -- lane -> w coordinate.
    h_idx  : (1, H*W) i32 -- lane -> h coordinate.
    """
    HW = H * W
    last = x.ndim - 1

    # Horizontal (w +/- 1) neighbours: lane rolls + border masks.  The roll
    # wraps across row boundaries, but those lanes are exactly the image
    # borders, which the mask zeroes (== the conv's zero padding).
    x_l = jnp.where(w_idx >= 1, pltpu.roll(x, 1, axis=last), 0.0)          # x[h, w-1]
    x_r = jnp.where(w_idx < W - 1, pltpu.roll(x, HW - 1, axis=last), 0.0)  # x[h, w+1]
    xs = (x_l, x, x_r)

    # Per-channel taps as (Cb, 1) columns -> plain lane-broadcast vector FMAs
    # (hoisted once per block; no per-tap SMEM scalar broadcasts).
    tap = [taps[:, j:j + 1] for j in range(9)]

    acc = jnp.zeros_like(x)
    for ki in range(3):
        t = xs[0] * tap[3 * ki] + xs[1] * tap[3 * ki + 1] + xs[2] * tap[3 * ki + 2]
        if ki == 0:      # needs row h-1  ->  result[l] = t[l - W]
            t = jnp.where(h_idx >= 1, pltpu.roll(t, W, axis=last), 0.0)
        elif ki == 2:    # needs row h+1  ->  result[l] = t[l + W]
            t = jnp.where(h_idx < H - 1, pltpu.roll(t, HW - W, axis=last), 0.0)
        acc = acc + t
    return acc


def _frelu_stats_kernel(idx_ref, tap_ref, x_ref, out_ref, acc_ref, *, H, W):
    """Pass 1: per-channel sum / sum-of-squares of conv = dwconv3x3(x).

    grid = (C//Cb, N//Nb); the batch (reduction) axis is innermost and
    "arbitrary" so the output block and the VMEM accumulator stay resident
    across it.  Do NOT reorder the grid axes or mark the batch axis
    "parallel" -- the reduction relies on this.
    """
    n = pl.program_id(1)

    @pl.when(n == 0)
    def _init():
        acc_ref[...] = jnp.zeros_like(acc_ref)

    idx = idx_ref[...]
    conv = _dwconv3x3_flat(x_ref[...].astype(jnp.float32), tap_ref[...],
                           idx[0:1, :], idx[1:2, :], H, W)
    acc_ref[0] += jnp.sum(conv, axis=0)            # elementwise (Cb, HW) adds
    acc_ref[1] += jnp.sum(conv * conv, axis=0)

    @pl.when(n == pl.num_programs(1) - 1)
    def _finish():
        # Single cross-lane (XLU) reduction per channel block.
        out_ref[...] = jnp.sum(acc_ref[...], axis=-1, keepdims=True)


def _frelu_apply_kernel(idx_ref, tap_ref, scale_ref, off_ref, x_ref, o_ref, *, H, W):
    """Pass 2: out = max(x, scale_c * dwconv3x3(x) + offset_c)."""
    idx = idx_ref[...]
    xf = x_ref[...].astype(jnp.float32)
    conv = _dwconv3x3_flat(xf, tap_ref[...], idx[0:1, :], idx[1:2, :], H, W)
    y = conv * scale_ref[...] + off_ref[...]       # (Cb, 1) per-channel affine
    o_ref[...] = jnp.maximum(xf, y).astype(o_ref.dtype)


def _divisors(n):
    return [d for d in range(1, n + 1) if n % d == 0]


def _choose_tiles(N, C, HW, itemsize, target_bytes):
    """Pick (Nb, Cb): Cb | C with (Cb % 8 == 0 or Cb == C) to satisfy the TPU
    (8, 128) block rule on the second-to-last dim, Nb | N, aiming for
    ~target_bytes per block."""
    c_cands = [d for d in _divisors(C) if d % 8 == 0 or d == C]
    c_fit = [d for d in c_cands if d * HW * itemsize <= target_bytes]
    Cb = max(c_fit) if c_fit else min(c_cands)
    n_fit = [d for d in _divisors(N) if d * Cb * HW * itemsize <= target_bytes]
    Nb = max(n_fit) if n_fit else 1
    return Nb, Cb


def frelu_pallas(x, conv_w, conv_b, bn_gamma, bn_beta, eps=1e-5,
                 target_block_bytes=2 << 20):
    """x: (N, C, H, W); conv_w: (C, 1, 3, 3) depthwise weights; others: (C,)."""
    N, C, H, W = x.shape
    HW = H * W
    x_flat = x.reshape(N, C, HW)                   # free reshape, stays NCHW

    taps = conv_w.reshape(C, 9).astype(jnp.float32)
    bias = conv_b.astype(jnp.float32)

    # lane -> (w, h) coordinate planes, computed once outside the kernels.
    lane = jnp.arange(HW, dtype=jnp.int32)
    hw_idx = jnp.stack([lane % W, lane // W], axis=0)      # (2, HW) int32

    itemsize = max(x.dtype.itemsize, 4)
    Nb, Cb = _choose_tiles(N, C, HW, itemsize, target_block_bytes)
    gc, gn = C // Cb, N // Nb

    blk_bytes = Nb * Cb * HW * itemsize
    acc_bytes = 2 * Cb * HW * 4
    # Double-buffered block footprints (+ headroom).  Cap at 48 MiB so this
    # tiling fits v7x's 64 MiB VMEM; on v5e/v6e (128 MiB) we may exceed the
    # 32 MiB default scoped limit when blocks are large.
    vmem_need = max(2 * blk_bytes + acc_bytes, 4 * blk_bytes)
    vmem_limit = int(min(48 << 20, max(4 << 20, 2 * vmem_need)))

    flops = 20 * N * C * HW
    x_bytes = int(x.size) * x.dtype.itemsize

    # ---- Pass 1: exact (train-mode) per-channel batch statistics -----------
    stats = pl.pallas_call(
        functools.partial(_frelu_stats_kernel, H=H, W=W),
        grid=(gc, gn),
        in_specs=[
            pl.BlockSpec((2, HW), lambda c, n: (0, 0)),           # hw_idx
            pl.BlockSpec((Cb, 9), lambda c, n: (c, 0)),           # taps
            pl.BlockSpec((Nb, Cb, HW), lambda c, n: (n, c, 0)),   # x
        ],
        out_specs=pl.BlockSpec((2, Cb, 1), lambda c, n: (0, c, 0)),
        out_shape=jax.ShapeDtypeStruct((2, C, 1), jnp.float32),
        scratch_shapes=[pltpu.VMEM((2, Cb, HW), jnp.float32)],
        compiler_params=pltpu.CompilerParams(
            dimension_semantics=("parallel", "arbitrary"),
            vmem_limit_bytes=vmem_limit),
        cost_estimate=pl.CostEstimate(flops=flops, transcendentals=0,
                                      bytes_accessed=x_bytes),
    )(hw_idx, taps, x_flat)

    # Fold BN (batch stats) + conv bias into one per-channel affine.
    # (The conv bias only shifts the mean, which BN subtracts again.)
    n_red = N * HW
    mean_c = stats[0, :, 0] / n_red                      # mean of conv (no bias)
    var_c = jnp.maximum(stats[1, :, 0] / n_red - mean_c * mean_c, 0.0)
    mean_dx = mean_c + bias
    scale = bn_gamma.astype(jnp.float32) * jax.lax.rsqrt(var_c + eps)
    offset = bn_beta.astype(jnp.float32) + scale * (bias - mean_dx)

    # ---- Pass 2: apply affine + funnel max ----------------------------------
    out_flat = pl.pallas_call(
        functools.partial(_frelu_apply_kernel, H=H, W=W),
        grid=(gn, gc),
        in_specs=[
            pl.BlockSpec((2, HW), lambda n, c: (0, 0)),           # hw_idx
            pl.BlockSpec((Cb, 9), lambda n, c: (c, 0)),           # taps
            pl.BlockSpec((Cb, 1), lambda n, c: (c, 0)),           # scale
            pl.BlockSpec((Cb, 1), lambda n, c: (c, 0)),           # offset
            pl.BlockSpec((Nb, Cb, HW), lambda n, c: (n, c, 0)),   # x
        ],
        out_specs=pl.BlockSpec((Nb, Cb, HW), lambda n, c: (n, c, 0)),
        out_shape=jax.ShapeDtypeStruct((N, C, HW), x.dtype),
        compiler_params=pltpu.CompilerParams(
            dimension_semantics=("parallel", "parallel"),
            vmem_limit_bytes=vmem_limit),
        cost_estimate=pl.CostEstimate(flops=flops, transcendentals=0,
                                      bytes_accessed=2 * x_bytes),
    )(hw_idx, taps, scale.reshape(C, 1), offset.reshape(C, 1), x_flat)

    return out_flat.reshape(N, C, H, W)


def frelu_reference(x_nchw, conv_w, conv_b, bn_gamma, bn_beta, eps=1e-5):
    """Plain-JAX reference matching the PyTorch FReLU forward (train-mode BN)."""
    N, C, H, W = x_nchw.shape
    dx = jax.lax.conv_general_dilated(
        x_nchw, conv_w, window_strides=(1, 1), padding=((1, 1), (1, 1)),
        dimension_numbers=("NCHW", "OIHW", "NCHW"), feature_group_count=C,
    ) + conv_b.reshape(1, C, 1, 1)
    mean = jnp.mean(dx, axis=(0, 2, 3), keepdims=True)
    var = jnp.mean((dx - mean) ** 2, axis=(0, 2, 3), keepdims=True)
    y = (dx - mean) * jax.lax.rsqrt(var + eps)
    y = y * bn_gamma.reshape(1, C, 1, 1) + bn_beta.reshape(1, C, 1, 1)
    return jnp.maximum(x_nchw, y)


if __name__ == "__main__":
    key = jax.random.PRNGKey(0)
    k_x, k_w, k_b, k_g, k_be = jax.random.split(key, 5)

    N, C, H, W = 2, 4, 16, 16
    x = jax.random.normal(k_x, (N, C, H, W), dtype=jnp.float32)

    # Parameter shapes follow nn.Conv2d(inp, inp, 3, padding=1, groups=inp)
    # and nn.BatchNorm2d(inp); gamma/beta are perturbed from their defaults so
    # the affine path is actually exercised.
    conv_w = jax.random.normal(k_w, (C, 1, 3, 3), dtype=jnp.float32) * 0.1
    conv_b = jax.random.normal(k_b, (C,), dtype=jnp.float32) * 0.1
    bn_gamma = 1.0 + 0.1 * jax.random.normal(k_g, (C,), dtype=jnp.float32)
    bn_beta = 0.1 * jax.random.normal(k_be, (C,), dtype=jnp.float32)

    out = frelu_pallas(x, conv_w, conv_b, bn_gamma, bn_beta)
    out = jax.block_until_ready(out)

    ref = frelu_reference(x, conv_w, conv_b, bn_gamma, bn_beta)
    np.testing.assert_allclose(np.asarray(out), np.asarray(ref), rtol=1e-4, atol=1e-4)

    print("KERNEL_OK")
</pallas_src>

<mosaic_0001>
module attributes {stable_mosaic.version = 11 : i64} {
  func.func @_frelu_stats_kernel(%arg0: i32, %arg1: i32, %arg2: memref<2x256xi32, #tpu.memory_space<vmem>>, %arg3: memref<4x9xf32, #tpu.memory_space<vmem>>, %arg4: memref<2x4x256xf32, #tpu.memory_space<vmem>>, %arg5: memref<2x4x1xf32, #tpu.memory_space<vmem>>, %arg6: memref<2x4x256xf32, #tpu.memory_space<vmem>>) attributes {dimension_semantics = [#tpu.dimension_semantics<parallel>, #tpu.dimension_semantics<arbitrary>], iteration_bounds = array<i64: 1, 1>, scalar_prefetch = 0 : i64, scratch_operands = 1 : i64, tpu.core_type = #tpu.core_type<tc>, window_params = [{pipeline_mode = #tpu.pipeline_mode<synchronous>, transform_indices = @transform_0, window_bounds = array<i64: 2, 256>}, {transform_indices = @transform_1, window_bounds = array<i64: 4, 9>}, {transform_indices = @transform_2, window_bounds = array<i64: 2, 4, 256>}, {transform_indices = @transform_3, window_bounds = array<i64: 2, 4, 1>}]} {
    %c0_i32 = arith.constant 0 : i32
    %0 = arith.cmpi eq, %arg1, %c0_i32 : i32
    %1 = arith.extui %0 : i1 to i32
    %c0_i32_0 = arith.constant 0 : i32
    %2 = arith.cmpi ne, %1, %c0_i32_0 : i32
    scf.if %2 {
      %cst_29 = arith.constant 0.000000e+00 : f32
      %100 = vector.broadcast %cst_29 : f32 to vector<2x4x256xf32>
      %c0_30 = arith.constant 0 : index
      %c0_31 = arith.constant 0 : index
      %c0_32 = arith.constant 0 : index
      %101 = vector.load %arg6[%c0_30, %c0_31, %c0_32] : memref<2x4x256xf32, #tpu.memory_space<vmem>>, vector<2x4x256xf32>
      tpu.vector_store %arg6[%c0_30, %c0_31, %c0_32], %100 {strides = array<i32>} : memref<2x4x256xf32, #tpu.memory_space<vmem>>, vector<2x4x256xf32>,
    } else {
    }
    %c0 = arith.constant 0 : index
    %c0_1 = arith.constant 0 : index
    %3 = vector.load %arg2[%c0, %c0_1] : memref<2x256xi32, #tpu.memory_space<vmem>>, vector<2x256xi32>
    %c0_2 = arith.constant 0 : index
    %c0_3 = arith.constant 0 : index
    %c0_4 = arith.constant 0 : index
    %4 = vector.load %arg4[%c0_2, %c0_3, %c0_4] : memref<2x4x256xf32, #tpu.memory_space<vmem>>, vector<2x4x256xf32>
    %c0_5 = arith.constant 0 : index
    %c0_6 = arith.constant 0 : index
    %5 = vector.load %arg3[%c0_5, %c0_6] : memref<4x9xf32, #tpu.memory_space<vmem>>, vector<4x9xf32>
    %6 = vector.extract_strided_slice %3 {offsets = [0, 0], sizes = [1, 256], strides = [1, 1]} : vector<2x256xi32> to vector<1x256xi32>
    %7 = vector.extract_strided_slice %3 {offsets = [1, 0], sizes = [1, 256], strides = [1, 1]} : vector<2x256xi32> to vector<1x256xi32>
    %c1_i32 = arith.constant 1 : i32
    %8 = vector.broadcast %c1_i32 : i32 to vector<1x256xi32>
    %9 = arith.cmpi sge, %6, %8 : vector<1x256xi32>
    %c1_i32_7 = arith.constant 1 : i32
    %10 = tpu.dynamic_rotate %4 by %c1_i32_7 dim 2 : vector<2x4x256xf32>, i32 -> vector<2x4x256xf32>
    %cst = arith.constant 0.000000e+00 : f32
    %11 = vector.shape_cast %9 : vector<1x256xi1> to vector<1x1x256xi1>
    %12 = vector.broadcast %11 : vector<1x1x256xi1> to vector<2x4x256xi1>
    %13 = vector.broadcast %cst : f32 to vector<2x4x256xf32>
    %14 = arith.select %12, %10, %13 : vector<2x4x256xi1>, vector<2x4x256xf32>
    %c15_i32 = arith.constant 15 : i32
    %15 = vector.broadcast %c15_i32 : i32 to vector<1x256xi32>
    %16 = arith.cmpi slt, %6, %15 : vector<1x256xi32>
    %c255_i32 = arith.constant 255 : i32
    %17 = tpu.dynamic_rotate %4 by %c255_i32 dim 2 : vector<2x4x256xf32>, i32 -> vector<2x4x256xf32>
    %cst_8 = arith.constant 0.000000e+00 : f32
    %18 = vector.shape_cast %16 : vector<1x256xi1> to vector<1x1x256xi1>
    %19 = vector.broadcast %18 : vector<1x1x256xi1> to vector<2x4x256xi1>
    %20 = vector.broadcast %cst_8 : f32 to vector<2x4x256xf32>
    %21 = arith.select %19, %17, %20 : vector<2x4x256xi1>, vector<2x4x256xf32>
    %22 = vector.extract_strided_slice %5 {offsets = [0, 0], sizes = [4, 1], strides = [1, 1]} : vector<4x9xf32> to vector<4x1xf32>
    %23 = vector.extract_strided_slice %5 {offsets = [0, 1], sizes = [4, 1], strides = [1, 1]} : vector<4x9xf32> to vector<4x1xf32>
    %24 = vector.extract_strided_slice %5 {offsets = [0, 2], sizes = [4, 1], strides = [1, 1]} : vector<4x9xf32> to vector<4x1xf32>
    %25 = vector.extract_strided_slice %5 {offsets = [0, 3], sizes = [4, 1], strides = [1, 1]} : vector<4x9xf32> to vector<4x1xf32>
    %26 = vector.extract_strided_slice %5 {offsets = [0, 4], sizes = [4, 1], strides = [1, 1]} : vector<4x9xf32> to vector<4x1xf32>
    %27 = vector.extract_strided_slice %5 {offsets = [0, 5], sizes = [4, 1], strides = [1, 1]} : vector<4x9xf32> to vector<4x1xf32>
    %28 = vector.extract_strided_slice %5 {offsets = [0, 6], sizes = [4, 1], strides = [1, 1]} : vector<4x9xf32> to vector<4x1xf32>
    %29 = vector.extract_strided_slice %5 {offsets = [0, 7], sizes = [4, 1], strides = [1, 1]} : vector<4x9xf32> to vector<4x1xf32>
    %30 = vector.extract_strided_slice %5 {offsets = [0, 8], sizes = [4, 1], strides = [1, 1]} : vector<4x9xf32> to vector<4x1xf32>
    %cst_9 = arith.constant 0.000000e+00 : f32
    %31 = vector.broadcast %cst_9 : f32 to vector<2x4x256xf32>
    %32 = vector.shape_cast %22 : vector<4x1xf32> to vector<1x4x1xf32>
    %33 = vector.broadcast %32 : vector<1x4x1xf32> to vector<2x4x256xf32>
    %34 = arith.mulf %14, %33 : vector<2x4x256xf32>
    %35 = vector.shape_cast %23 : vector<4x1xf32> to vector<1x4x1xf32>
    %36 = vector.broadcast %35 : vector<1x4x1xf32> to vector<2x4x256xf32>
    %37 = arith.mulf %4, %36 : vector<2x4x256xf32>
    %38 = arith.addf %34, %37 : vector<2x4x256xf32>
    %39 = vector.shape_cast %24 : vector<4x1xf32> to vector<1x4x1xf32>
    %40 = vector.broadcast %39 : vector<1x4x1xf32> to vector<2x4x256xf32>
    %41 = arith.mulf %21, %40 : vector<2x4x256xf32>
    %42 = arith.addf %38, %41 : vector<2x4x256xf32>
    %c1_i32_10 = arith.constant 1 : i32
    %43 = vector.broadcast %c1_i32_10 : i32 to vector<1x256xi32>
    %44 = arith.cmpi sge, %7, %43 : vector<1x256xi32>
    %c16_i32 = arith.constant 16 : i32
    %45 = tpu.dynamic_rotate %42 by %c16_i32 dim 2 : vector<2x4x256xf32>, i32 -> vector<2x4x256xf32>
    %cst_11 = arith.constant 0.000000e+00 : f32
    %46 = vector.shape_cast %44 : vector<1x256xi1> to vector<1x1x256xi1>
    %47 = vector.broadcast %46 : vector<1x1x256xi1> to vector<2x4x256xi1>
    %48 = vector.broadcast %cst_11 : f32 to vector<2x4x256xf32>
    %49 = arith.select %47, %45, %48 : vector<2x4x256xi1>, vector<2x4x256xf32>
    %50 = arith.addf %31, %49 : vector<2x4x256xf32>
    %51 = vector.shape_cast %25 : vector<4x1xf32> to vector<1x4x1xf32>
    %52 = vector.broadcast %51 : vector<1x4x1xf32> to vector<2x4x256xf32>
    %53 = arith.mulf %14, %52 : vector<2x4x256xf32>
    %54 = vector.shape_cast %26 : vector<4x1xf32> to vector<1x4x1xf32>
    %55 = vector.broadcast %54 : vector<1x4x1xf32> to vector<2x4x256xf32>
    %56 = arith.mulf %4, %55 : vector<2x4x256xf32>
    %57 = arith.addf %53, %56 : vector<2x4x256xf32>
    %58 = vector.shape_cast %27 : vector<4x1xf32> to vector<1x4x1xf32>
    %59 = vector.broadcast %58 : vector<1x4x1xf32> to vector<2x4x256xf32>
    %60 = arith.mulf %21, %59 : vector<2x4x256xf32>
    %61 = arith.addf %57, %60 : vector<2x4x256xf32>
    %62 = arith.addf %50, %61 : vector<2x4x256xf32>
    %63 = vector.shape_cast %28 : vector<4x1xf32> to vector<1x4x1xf32>
    %64 = vector.broadcast %63 : vector<1x4x1xf32> to vector<2x4x256xf32>
    %65 = arith.mulf %14, %64 : vector<2x4x256xf32>
    %66 = vector.shape_cast %29 : vector<4x1xf32> to vector<1x4x1xf32>
    %67 = vector.broadcast %66 : vector<1x4x1xf32> to vector<2x4x256xf32>
    %68 = arith.mulf %4, %67 : vector<2x4x256xf32>
    %69 = arith.addf %65, %68 : vector<2x4x256xf32>
    %70 = vector.shape_cast %30 : vector<4x1xf32> to vector<1x4x1xf32>
    %71 = vector.broadcast %70 : vector<1x4x1xf32> to vector<2x4x256xf32>
    %72 = arith.mulf %21, %71 : vector<2x4x256xf32>
    %73 = arith.addf %69, %72 : vector<2x4x256xf32>
    %c15_i32_12 = arith.constant 15 : i32
    %74 = vector.broadcast %c15_i32_12 : i32 to vector<1x256xi32>
    %75 = arith.cmpi slt, %7, %74 : vector<1x256xi32>
    %c240_i32 = arith.constant 240 : i32
    %76 = tpu.dynamic_rotate %73 by %c240_i32 dim 2 : vector<2x4x256xf32>, i32 -> vector<2x4x256xf32>
    %cst_13 = arith.constant 0.000000e+00 : f32
    %77 = vector.shape_cast %75 : vector<1x256xi1> to vector<1x1x256xi1>
    %78 = vector.broadcast %77 : vector<1x1x256xi1> to vector<2x4x256xi1>
    %79 = vector.broadcast %cst_13 : f32 to vector<2x4x256xf32>
    %80 = arith.select %78, %76, %79 : vector<2x4x256xi1>, vector<2x4x256xf32>
    %81 = arith.addf %62, %80 : vector<2x4x256xf32>
    %c0_14 = arith.constant 0 : index
    %c0_15 = arith.constant 0 : index
    %c0_16 = arith.constant 0 : index
    %82 = vector.load %arg6[%c0_14, %c0_15, %c0_16] : memref<2x4x256xf32, #tpu.memory_space<vmem>>, vector<1x4x256xf32>
    %83 = vector.shape_cast %82 : vector<1x4x256xf32> to vector<4x256xf32>
    %cst_17 = arith.constant dense<0.000000e+00> : vector<4x256xf32>
    %84 = vector.multi_reduction <add>, %81, %cst_17 [0] : vector<2x4x256xf32> to vector<4x256xf32>
    %85 = arith.addf %83, %84 : vector<4x256xf32>
    %c0_18 = arith.constant 0 : index
    %c0_19 = arith.constant 0 : index
    %c0_20 = arith.constant 0 : index
    %86 = vector.load %arg6[%c0_18, %c0_19, %c0_20] : memref<2x4x256xf32, #tpu.memory_space<vmem>>, vector<1x4x256xf32>
    %87 = vector.shape_cast %86 : vector<1x4x256xf32> to vector<4x256xf32>
    %88 = vector.shape_cast %85 : vector<4x256xf32> to vector<1x4x256xf32>
    tpu.vector_store %arg6[%c0_18, %c0_19, %c0_20], %88 {strides = array<i32>} : memref<2x4x256xf32, #tpu.memory_space<vmem>>, vector<1x4x256xf32>,
    %c1 = arith.constant 1 : index
    %c0_21 = arith.constant 0 : index
    %c0_22 = arith.constant 0 : index
    %89 = vector.load %arg6[%c1, %c0_21, %c0_22] : memref<2x4x256xf32, #tpu.memory_space<vmem>>, vector<1x4x256xf32>
    %90 = vector.shape_cast %89 : vector<1x4x256xf32> to vector<4x256xf32>
    %91 = arith.mulf %81, %81 : vector<2x4x256xf32>
    %cst_23 = arith.constant dense<0.000000e+00> : vector<4x256xf32>
    %92 = vector.multi_reduction <add>, %91, %cst_23 [0] : vector<2x4x256xf32> to vector<4x256xf32>
    %93 = arith.addf %90, %92 : vector<4x256xf32>
    %c1_24 = arith.constant 1 : index
    %c0_25 = arith.constant 0 : index
    %c0_26 = arith.constant 0 : index
    %94 = vector.load %arg6[%c1_24, %c0_25, %c0_26] : memref<2x4x256xf32, #tpu.memory_space<vmem>>, vector<1x4x256xf32>
    %95 = vector.shape_cast %94 : vector<1x4x256xf32> to vector<4x256xf32>
    %96 = vector.shape_cast %93 : vector<4x256xf32> to vector<1x4x256xf32>
    tpu.vector_store %arg6[%c1_24, %c0_25, %c0_26], %96 {strides = array<i32>} : memref<2x4x256xf32, #tpu.memory_space<vmem>>, vector<1x4x256xf32>,
    %c0_i32_27 = arith.constant 0 : i32
    %97 = arith.cmpi eq, %arg1, %c0_i32_27 : i32
    %98 = arith.extui %97 : i1 to i32
    %c0_i32_28 = arith.constant 0 : i32
    %99 = arith.cmpi ne, %98, %c0_i32_28 : i32
    scf.if %99 {
      %c0_29 = arith.constant 0 : index
      %c0_30 = arith.constant 0 : index
      %c0_31 = arith.constant 0 : index
      %100 = vector.load %arg6[%c0_29, %c0_30, %c0_31] : memref<2x4x256xf32, #tpu.memory_space<vmem>>, vector<2x4x256xf32>
      %cst_32 = arith.constant dense<0.000000e+00> : vector<2x4xf32>
      %101 = vector.multi_reduction <add>, %100, %cst_32 [2] : vector<2x4x256xf32> to vector<2x4xf32>
      %102 = vector.shape_cast %101 : vector<2x4xf32> to vector<2x4x1xf32>
      %c0_33 = arith.constant 0 : index
      %c0_34 = arith.constant 0 : index
      %c0_35 = arith.constant 0 : index
      %103 = vector.load %arg5[%c0_33, %c0_34, %c0_35] : memref<2x4x1xf32, #tpu.memory_space<vmem>>, vector<2x4x1xf32>
      tpu.vector_store %arg5[%c0_33, %c0_34, %c0_35], %102 {strides = array<i32>} : memref<2x4x1xf32, #tpu.memory_space<vmem>>, vector<2x4x1xf32>,
    } else {
    }
    return
  }
  func.func @transform_0(%arg0: i32, %arg1: i32) -> (i32, i32) {
    %c0_i32 = arith.constant 0 : i32
    %c0_i32_0 = arith.constant 0 : i32
    %c0_i32_1 = arith.constant 0 : i32
    return %c0_i32, %c0_i32_0 : i32, i32
  }
  func.func @transform_1(%arg0: i32, %arg1: i32) -> (i32, i32) {
    %c0_i32 = arith.constant 0 : i32
    %c0_i32_0 = arith.constant 0 : i32
    return %arg0, %c0_i32 : i32, i32
  }
  func.func @transform_2(%arg0: i32, %arg1: i32) -> (i32, i32, i32) {
    %c0_i32 = arith.constant 0 : i32
    %c0_i32_0 = arith.constant 0 : i32
    return %arg1, %arg0, %c0_i32 : i32, i32, i32
  }
  func.func @transform_3(%arg0: i32, %arg1: i32) -> (i32, i32, i32) {
    %c0_i32 = arith.constant 0 : i32
    %c0_i32_0 = arith.constant 0 : i32
    %c0_i32_1 = arith.constant 0 : i32
    return %c0_i32, %arg0, %c0_i32_0 : i32, i32, i32
  }
}

</mosaic_0001>

<llo_original>
// kernel: tpu_custom_call.1
$region0: #{tpu_custom_call.1}
  #allocation0 [shape = 'u32[]', space=smem, size = 0x4, offset = 0x4, fixed_abs, tag = 'smem constant byte address 0x4 - core index']
  #allocation1 [shape = 'u32[144,128]{1,0:T(1,128)}', space=vmem, size = 0x12000, scoped, tag = 'internal scratch']
  #allocation2 [shape = 'f32[2,4,256]{2,1,0:T(4,128)}', space=vmem, size = 0x2000, scoped, tag = 'scratch operand']
  %s0 = inlined_call_operand.hbm [shape: s32[2,256], index: 0, kind: input, shape index: {}]
  %s1 = inlined_call_operand.hbm [shape: f32[4,9], index: 1, kind: input, shape index: {}]
  %s2 = inlined_call_operand.hbm [shape: f32[2,4,256], index: 2, kind: input, shape index: {}]
  %s3 = inlined_call_operand.vmem [shape: f32[2,4,1], index: 3, kind: output, shape index: {}]
  %s4 = sld [smem:[#allocation0]]
  $region42: #{tpu_custom_call.1} parent=0
    _
  %s6 = ssub.s32 1, %s4
  %s7 = scalar_select 0, %s6, %s4
  $region1: #{tpu_custom_call.1} parent=0
    #allocation3 [shape = 'u8[2048]{0}', space=vmem, size = 0x800, scoped, tag = 'input window, operand 0, single buffered']
    #allocation4 [shape = 's32[1]{0}', space=sflag, size = 0x4, scoped, tag = 'scoped memory for tpu_custom_call.1']
    #allocation5 [shape = 'u8[2048]{0}', space=vmem, size = 0x800, scoped, tag = 'input window, operand 1, single buffered']
    #allocation6 [shape = 's32[1]{0}', space=sflag, size = 0x4, scoped, tag = 'scoped memory for tpu_custom_call.1']
    #allocation7 [shape = 'u8[8192]{0}', space=vmem, size = 0x2000, scoped, tag = 'input window, operand 2, single buffered']
    %8 = vsyncpa [#allocation4], 0
    %9 = vsyncpa [#allocation6], 0
    // Predicated region
    $region2: #{tpu_custom_call.1} parent=1 // pred_check
      _
    $region3: #{tpu_custom_call.1} parent=1 // pred_check_branch
      %11 = sbr.rel (0) target = $region5
    $region4: #{tpu_custom_call.1} parent=1 // pred_region
      %s13 = ssub.s32 64, 64
      %14 = vsyncadd [#allocation4], %s13
      %s16 = sshll.u32 [#allocation3], 4
      %s17 = int_to_ptr.vmem [resolvable:$true] %s16
      %19 = dma.hbm_to_vmem [thread:$0]  %s0, 64, %s17, [#allocation4]
    $region5: #{tpu_custom_call.1} parent=1 // pred_fallthru
      _
    // Predicated region
    $region6: #{tpu_custom_call.1} parent=1 // pred_check
      _
    $region7: #{tpu_custom_call.1} parent=1 // pred_check_branch
      %21 = sbr.rel (0) target = $region9
    $region8: #{tpu_custom_call.1} parent=1 // pred_region
      %s23 = ssub.s32 64, 64
      %24 = vsyncadd [#allocation6], %s23
      %s26 = sshll.u32 [#allocation5], 4
      %s27 = int_to_ptr.vmem [resolvable:$true] %s26
      %29 = dma.hbm_to_vmem [thread:$0]  %s1, 64, %s27, [#allocation6]
    $region9: #{tpu_custom_call.1} parent=1 // pred_fallthru
      _
    // Predicated region
    $region10: #{tpu_custom_call.1} parent=1 // pred_check
      _
    $region11: #{tpu_custom_call.1} parent=1 // pred_check_branch
      %31 = sbr.rel (0) target = $region13
    $region12: #{tpu_custom_call.1} parent=1 // pred_region
      %s33 = ssub.s32 256, 256
      %34 = vsyncadd [#allocation6], %s33
      %s35 = sshll.u32 [#allocation7], 4
      %s36 = int_to_ptr.vmem [resolvable:$true] %s35
      %41 = dma.hbm_to_vmem [thread:$0]  %s2, 256, %s36, [#allocation6], 128, 128, 8
    $region13: #{tpu_custom_call.1} parent=1 // pred_fallthru
      _
    // Predicated region
    $region14: #{tpu_custom_call.1} parent=1 // pred_check
      _
    $region15: #{tpu_custom_call.1} parent=1 // pred_check_branch
      %43 = sbr.rel (0) target = $region17
    $region16: #{tpu_custom_call.1} parent=1 // pred_region
      %44 = dma.done [#allocation4], 64
    $region17: #{tpu_custom_call.1} parent=1 // pred_fallthru
      _
    // Predicated region
    $region18: #{tpu_custom_call.1} parent=1 // pred_check
      _
    $region19: #{tpu_custom_call.1} parent=1 // pred_check_branch
      %46 = sbr.rel (0) target = $region21
    $region20: #{tpu_custom_call.1} parent=1 // pred_region
      %47 = dma.done [#allocation6], 64
    $region21: #{tpu_custom_call.1} parent=1 // pred_fallthru
      _
    // Predicated region
    $region22: #{tpu_custom_call.1} parent=1 // pred_check
      _
    $region23: #{tpu_custom_call.1} parent=1 // pred_check_branch
      %49 = sbr.rel (0) target = $region25
    $region24: #{tpu_custom_call.1} parent=1 // pred_region
      %50 = dma.done [#allocation6], 256
    $region25: #{tpu_custom_call.1} parent=1 // pred_fallthru
      _
    %p51 = scmp.eq.s32.totalorder 0, 0
    // Predicated region
    $region26: #{tpu_custom_call.1} parent=1 // pred_check
      %p52 = pneg %p51
    $region27: #{tpu_custom_call.1} parent=1 // pred_check_branch
      %54 = sbr.rel (%p52) target = $region29
    $region28: #{tpu_custom_call.1} parent=1 // pred_region
      %55 = vst [vmem:[#allocation2] sm:$0xff] 0.0
      %56 = vst [vmem:[#allocation2 + $0x8] sm:$0xff] 0.0
    $region29: #{tpu_custom_call.1} parent=1 // pred_fallthru
      _
    %v57 = vld [vmem:[#allocation3] sm:$0xf]
    %v58 = vld [vmem:[#allocation7] sm:$0xff]
    %v59 = vld [vmem:[#allocation7 + $0x8] sm:$0xff]
    %v60 = vld [vmem:[#allocation5] sm:$0xf]
    %vm61 = vcmp.ge.s32.totalorder %v57, 1
    %v64 = vcombine.high %v58, %v58
    %v65 = vcombine.high %v59, %v59
    %68 = vrot.lane.b32.xlu0 %v58, 1
    %v69 = vpop.permute.xlu0 %68
    %70 = vrot.lane.b32.xlu0 %v59, 1
    %v71 = vpop.permute.xlu0 %70
    %72 = vrot.lane.b32.xlu0 %v64, 1
    %v73 = vpop.permute.xlu0 %72
    %74 = vrot.lane.b32.xlu0 %v65, 1
    %v75 = vpop.permute.xlu0 %74
    %v76 = vlaneseq
    %v77 = vand.u32 %v76, 127
    %vm78 = vcmp.lt.s32.totalorder %v77, 1
    %v79 = vsel %vm78, %v69, %v73
    %v80 = vsel %vm78, %v71, %v75
    %v81 = vsel %vm78, %v73, %v69
    %v82 = vsel %vm78, %v75, %v71
    %v83 = vsel %vm61, 1, 0
    %v84 = vlaneseq
    %v85 = vshrl.u32 %v84, 7
    %v86 = vsub.s32 0, %v85
    %v87 = vrot.slane %v83, %v86
    %v88 = vlaneseq
    %v89 = vshrl.u32 %v88, 7
    %v90 = vsub.s32 2, %v89
    %v91 = vrot.slane %v83, %v90
    %v92 = vlaneseq
    %v93 = vshrl.u32 %v92, 7
    %v94 = vsub.s32 0, %v93
    %v95 = vrot.slane %v87, %v94
    %v96 = vlaneseq
    %v97 = vshrl.u32 %v96, 7
    %v98 = vsub.s32 0, %v97
    %v99 = vrot.slane %v91, %v98
    %vm100 = vcmp.eq.s32.totalorder %v95, 1
    %vm101 = vcmp.eq.s32.totalorder %v99, 1
    %v102 = vsel %vm100, %v81, 0.0
    %v103 = vsel %vm101, %v79, 0.0
    %v104 = vsel %vm100, %v82, 0.0
    %v105 = vsel %vm101, %v80, 0.0
    %vm106 = vcmp.lt.s32.totalorder %v57, 15
    %107 = vrot.lane.b32.xlu0 %v58, 127
    %v108 = vpop.permute.xlu0 %107
    %109 = vrot.lane.b32.xlu0 %v59, 127
    %v110 = vpop.permute.xlu0 %109
    %111 = vrot.lane.b32.xlu0 %v64, 127
    %v112 = vpop.permute.xlu0 %111
    %113 = vrot.lane.b32.xlu0 %v65, 127
    %v114 = vpop.permute.xlu0 %113
    %vm115 = vcmp.lt.s32.totalorder %v77, 127
    %v116 = vsel %vm115, %v108, %v112
    %v117 = vsel %vm115, %v110, %v114
    %v118 = vsel %vm115, %v112, %v108
    %v119 = vsel %vm115, %v114, %v110
    %v120 = vsel %vm106, 1, 0
    %v121 = vlaneseq
    %v122 = vshrl.u32 %v121, 7
    %v123 = vsub.s32 0, %v122
    %v124 = vrot.slane %v120, %v123
    %v125 = vlaneseq
    %v126 = vshrl.u32 %v125, 7
    %v127 = vsub.s32 2, %v126
    %v128 = vrot.slane %v120, %v127
    %v129 = vlaneseq
    %v130 = vshrl.u32 %v129, 7
    %v131 = vsub.s32 0, %v130
    %v132 = vrot.slane %v124, %v131
    %v133 = vlaneseq
    %v134 = vshrl.u32 %v133, 7
    %v135 = vsub.s32 0, %v134
    %v136 = vrot.slane %v128, %v135
    %vm137 = vcmp.eq.s32.totalorder %v132, 1
    %vm138 = vcmp.eq.s32.totalorder %v136, 1
    %v139 = vsel %vm137, %v116, 0.0
    %v140 = vsel %vm138, %v118, 0.0
    %v141 = vsel %vm137, %v117, 0.0
    %v142 = vsel %vm138, %v119, 0.0
    %144 = vset.pattern.permute.xlu0 0
    %145 = vperm.xlu0 %144, %v60
    %v146 = vpop.permute.xlu0 %145
    %v148 = vmul.f32 %v102, %v146
    %v149 = vmul.f32 %v103, %v146
    %v150 = vmul.f32 %v104, %v146
    %v151 = vmul.f32 %v105, %v146
    %152 = vset.pattern.permute.xlu0 1
    %153 = vperm.xlu0 %152, %v60
    %v154 = vpop.permute.xlu0 %153
    %v156 = vunpack.c.l.s4 839922192
    %v157 = vunpack.c.0.s8 %v156
    %v158 = vlaneseq
    %v159 = vshrl.u32 %v158, 7
    %v160 = vsub.s32 %v157, %v159
    %v161 = vrot.slane %v154, %v160
    %v163 = vmul.f32 %v58, %v161
    %v164 = vmul.f32 %v59, %v161
    %v167 = vcombine.high %v163, %v163
    %v168 = vcombine.high %v164, %v164
    %v171 = vadd.f32 %v148, %v163
    %v172 = vadd.f32 %v149, %v167
    %v173 = vadd.f32 %v150, %v164
    %v174 = vadd.f32 %v151, %v168
    %175 = vset.pattern.permute.xlu0 2
    %176 = vperm.xlu0 %175, %v60
    %v177 = vpop.permute.xlu0 %176
    %v179 = vmul.f32 %v139, %v177
    %v180 = vmul.f32 %v140, %v177
    %v181 = vmul.f32 %v141, %v177
    %v182 = vmul.f32 %v142, %v177
    %v183 = vadd.f32 %v171, %v179
    %v184 = vadd.f32 %v172, %v180
    %v185 = vadd.f32 %v173, %v181
    %v186 = vadd.f32 %v174, %v182
    %187 = vrot.lane.b32.xlu0 %v183, 16
    %v188 = vpop.permute.xlu0 %187
    %189 = vrot.lane.b32.xlu0 %v185, 16
    %v190 = vpop.permute.xlu0 %189
    %191 = vrot.lane.b32.xlu0 %v184, 16
    %v192 = vpop.permute.xlu0 %191
    %193 = vrot.lane.b32.xlu0 %v186, 16
    %v194 = vpop.permute.xlu0 %193
    %vm195 = vcmp.lt.s32.totalorder %v77, 16
    %v196 = vsel %vm195, %v188, %v192
    %v197 = vsel %vm195, %v190, %v194
    %v198 = vsel %vm195, %v192, %v188
    %v199 = vsel %vm195, %v194, %v190
    %v200 = vlaneseq
    %v201 = vshrl.u32 %v200, 7
    %v202 = vsub.s32 1, %v201
    %v203 = vrot.slane %v83, %v202
    %v204 = vlaneseq
    %v205 = vshrl.u32 %v204, 7
    %v206 = vsub.s32 3, %v205
    %v207 = vrot.slane %v83, %v206
    %v208 = vlaneseq
    %v209 = vshrl.u32 %v208, 7
    %v210 = vsub.s32 1, %v209
    %v211 = vrot.slane %v203, %v210
    %v212 = vlaneseq
    %v213 = vshrl.u32 %v212, 7
    %v214 = vsub.s32 1, %v213
    %v215 = vrot.slane %v207, %v214
    %vm216 = vcmp.eq.s32.totalorder %v211, 1
    %vm217 = vcmp.eq.s32.totalorder %v215, 1
    %v218 = vsel %vm216, %v198, 0.0
    %v219 = vsel %vm217, %v196, 0.0
    %v220 = vsel %vm216, %v199, 0.0
    %v221 = vsel %vm217, %v197, 0.0
    %v222 = vadd.f32 %v218, 0.0
    %v223 = vadd.f32 %v219, 0.0
    %v224 = vadd.f32 %v220, 0.0
    %v225 = vadd.f32 %v221, 0.0
    %226 = vset.pattern.permute.xlu0 3
    %227 = vperm.xlu0 %226, %v60
    %v228 = vpop.permute.xlu0 %227
    %v230 = vmul.f32 %v102, %v228
    %v231 = vmul.f32 %v103, %v228
    %v232 = vmul.f32 %v104, %v228
    %v233 = vmul.f32 %v105, %v228
    %234 = vset.pattern.permute.xlu0 4
    %235 = vperm.xlu0 %234, %v60
    %v236 = vpop.permute.xlu0 %235
    %v238 = vunpack.c.l.s4 839922192
    %v239 = vunpack.c.0.s8 %v238
    %v240 = vlaneseq
    %v241 = vshrl.u32 %v240, 7
    %v242 = vsub.s32 %v239, %v241
    %v243 = vrot.slane %v236, %v242
    %v245 = vmul.f32 %v58, %v243
    %v246 = vmul.f32 %v59, %v243
    %v249 = vcombine.high %v245, %v245
    %v250 = vcombine.high %v246, %v246
    %v253 = vadd.f32 %v230, %v245
    %v254 = vadd.f32 %v231, %v249
    %v255 = vadd.f32 %v232, %v246
    %v256 = vadd.f32 %v233, %v250
    %257 = vset.pattern.permute.xlu0 5
    %258 = vperm.xlu0 %257, %v60
    %v259 = vpop.permute.xlu0 %258
    %v261 = vmul.f32 %v139, %v259
    %v262 = vmul.f32 %v140, %v259
    %v263 = vmul.f32 %v141, %v259
    %v264 = vmul.f32 %v142, %v259
    %v265 = vadd.f32 %v253, %v261
    %v266 = vadd.f32 %v254, %v262
    %v267 = vadd.f32 %v255, %v263
    %v268 = vadd.f32 %v256, %v264
    %v269 = vadd.f32 %v222, %v265
    %v270 = vadd.f32 %v223, %v266
    %v271 = vadd.f32 %v224, %v267
    %v272 = vadd.f32 %v225, %v268
    %273 = vset.pattern.permute.xlu0 6
    %274 = vperm.xlu0 %273, %v60
    %v275 = vpop.permute.xlu0 %274
    %v277 = vmul.f32 %v102, %v275
    %v278 = vmul.f32 %v103, %v275
    %v279 = vmul.f32 %v104, %v275
    %v280 = vmul.f32 %v105, %v275
    %281 = vset.pattern.permute.xlu0 7
    %282 = vperm.xlu0 %281, %v60
    %v283 = vpop.permute.xlu0 %282
    %v285 = vunpack.c.l.s4 839922192
    %v286 = vunpack.c.0.s8 %v285
    %v287 = vlaneseq
    %v288 = vshrl.u32 %v287, 7
    %v289 = vsub.s32 %v286, %v288
    %v290 = vrot.slane %v283, %v289
    %v292 = vmul.f32 %v58, %v290
    %v293 = vmul.f32 %v59, %v290
    %v296 = vcombine.high %v292, %v292
    %v297 = vcombine.high %v293, %v293
    %v300 = vadd.f32 %v277, %v292
    %v301 = vadd.f32 %v278, %v296
    %v302 = vadd.f32 %v279, %v293
    %v303 = vadd.f32 %v280, %v297
    %304 = vset.pattern.permute.xlu0 8
    %305 = vperm.xlu0 %304, %v60
    %v306 = vpop.permute.xlu0 %305
    %v308 = vmul.f32 %v139, %v306
    %v309 = vmul.f32 %v140, %v306
    %v310 = vmul.f32 %v141, %v306
    %v311 = vmul.f32 %v142, %v306
    %v312 = vadd.f32 %v300, %v308
    %v313 = vadd.f32 %v301, %v309
    %v314 = vadd.f32 %v302, %v310
    %v315 = vadd.f32 %v303, %v311
    %316 = vrot.lane.b32.xlu0 %v312, 112
    %v317 = vpop.permute.xlu0 %316
    %318 = vrot.lane.b32.xlu0 %v314, 112
    %v319 = vpop.permute.xlu0 %318
    %320 = vrot.lane.b32.xlu0 %v313, 112
    %v321 = vpop.permute.xlu0 %320
    %322 = vrot.lane.b32.xlu0 %v315, 112
    %v323 = vpop.permute.xlu0 %322
    %vm324 = vcmp.lt.s32.totalorder %v77, 112
    %v325 = vsel %vm324, %v317, %v321
    %v326 = vsel %vm324, %v319, %v323
    %v327 = vsel %vm324, %v321, %v317
    %v328 = vsel %vm324, %v323, %v319
    %v329 = vlaneseq
    %v330 = vshrl.u32 %v329, 7
    %v331 = vsub.s32 1, %v330
    %v332 = vrot.slane %v120, %v331
    %v333 = vlaneseq
    %v334 = vshrl.u32 %v333, 7
    %v335 = vsub.s32 3, %v334
    %v336 = vrot.slane %v120, %v335
    %v337 = vlaneseq
    %v338 = vshrl.u32 %v337, 7
    %v339 = vsub.s32 1, %v338
    %v340 = vrot.slane %v332, %v339
    %v341 = vlaneseq
    %v342 = vshrl.u32 %v341, 7
    %v343 = vsub.s32 1, %v342
    %v344 = vrot.slane %v336, %v343
    %vm345 = vcmp.eq.s32.totalorder %v340, 1
    %vm346 = vcmp.eq.s32.totalorder %v344, 1
    %v347 = vsel %vm345, %v325, 0.0
    %v348 = vsel %vm346, %v327, 0.0
    %v349 = vsel %vm345, %v326, 0.0
    %v350 = vsel %vm346, %v328, 0.0
    %v351 = vadd.f32 %v269, %v347
    %v352 = vadd.f32 %v270, %v348
    %v353 = vadd.f32 %v271, %v349
    %v354 = vadd.f32 %v272, %v350
    %v355 = vld [vmem:[#allocation2] sm:$0xff]
    %vm356 = vcmask 1043456
    %v357 = vsel %vm356, %v351, 0.0
    %v358 = vsel %vm356, %v353, 0.0
    %v359 = vadd.f32 %v357, %v358
    %v360 = vsel %vm356, %v352, 0.0
    %v361 = vsel %vm356, %v354, 0.0
    %v362 = vadd.f32 %v360, %v361
    %v365 = vcombine.low %v359, %v362
    %v367 = vadd.f32 %v355, %v365
    %368 = vst [vmem:[#allocation2] sm:$0xff] %v367
    %s369 = scalar_lea.vmem [#allocation2], 8
    %v370 = vld [vmem:[%s369] sm:$0xff]
    %v371 = vmul.f32 %v351, %v351
    %v372 = vmul.f32 %v352, %v352
    %v373 = vmul.f32 %v353, %v353
    %v374 = vmul.f32 %v354, %v354
    %v375 = vsel %vm356, %v371, 0.0
    %v376 = vsel %vm356, %v373, 0.0
    %v377 = vadd.f32 %v375, %v376
    %v378 = vsel %vm356, %v372, 0.0
    %v379 = vsel %vm356, %v374, 0.0
    %v380 = vadd.f32 %v378, %v379
    %v383 = vcombine.low %v377, %v380
    %v385 = vadd.f32 %v370, %v383
    %386 = vst [vmem:[%s369] sm:$0xff] %v385
    // Predicated region
    $region30: #{tpu_custom_call.1} parent=1 // pred_check
      %p387 = pneg %p51
    $region31: #{tpu_custom_call.1} parent=1 // pred_check_branch
      %389 = sbr.rel (%p387) target = $region33
    $region32: #{tpu_custom_call.1} parent=1 // pred_region
      %v390 = vld [vmem:[#allocation2] sm:$0xff]
      %v391 = vld [vmem:[#allocation2 + $0x8] sm:$0xff]
      %v394 = vcombine.high %v390, %v390
      %v395 = vcombine.high %v391, %v391
      %v398 = vsel %vm356, %v390, 0.0
      %v399 = vsel %vm356, %v394, 0.0
      %v400 = vadd.f32 %v398, %v399
      %401 = vadd.xlane.f32.xlu0 %v400
      %v402 = vpop.xlane.xlu0 %401
      %v403 = vsel %vm356, %v391, 0.0
      %v404 = vsel %vm356, %v395, 0.0
      %v405 = vadd.f32 %v403, %v404
      %406 = vadd.xlane.f32.xlu0 %v405
      %v407 = vpop.xlane.xlu0 %406
      %vm408 = vcmask 3072
      %409 = vst.msk [vmem:[%s3] sm:$0xf] %vm408, %v402
      %410 = vst.msk [vmem:[%s3 + $0x4] sm:$0xf] %vm408, %v407
    $region33: #{tpu_custom_call.1} parent=1 // pred_fallthru
      _
    // Predicated region
    $region34: #{tpu_custom_call.1} parent=1 // pred_check
      _
    $region35: #{tpu_custom_call.1} parent=1 // pred_check_branch
      %412 = sbr.rel (0) target = $region37
    $region36: #{tpu_custom_call.1} parent=1 // pred_region
      _
    $region37: #{tpu_custom_call.1} parent=1 // pred_fallthru
      _
    // Predicated region
    $region38: #{tpu_custom_call.1} parent=1 // pred_check
      _
    $region39: #{tpu_custom_call.1} parent=1 // pred_check_branch
      %414 = sbr.rel (0) target = $region41
    $region40: #{tpu_custom_call.1} parent=1 // pred_region
      _
    $region41: #{tpu_custom_call.1} parent=1 // pred_fallthru
      _
    %415 = vsyncpa [#allocation4], 1
    %416 = vsyncpa [#allocation6], 1

</llo_original>
